<compile_context>
chip_gen: v6e
topology: v6e:2x2x1
jax: 0.10.0
libtpu: 0.0.40
codegen_flags: <defaults>
</compile_context>

<pallas_src>
import functools

import jax
import jax.numpy as jnp
from jax import lax
from jax.experimental import pallas as pl
from jax.experimental.pallas import tpu as pltpu

_LANES = 128
_NUM_CORES = 2          # leading "parallel" grid axis (v7x has 2 TensorCores per chip)
_ANCHOR_ALIGN = 2048    # keeps every lane-dense block (f32/bf16/int8) tiling-legal


def _round_up(x, m):
    return ((x + m - 1) // m) * m


def _cdiv(a, b):
    return (a + b - 1) // b


def _rloss_kernel(loc_p_ref, loc_t_ref, mask_ref, cls_p_ref, cls_t_ref,
                  out_loc_ref, out_cls_ref, acc_loc_ref, acc_cls_ref,
                  *, inner_steps, n_cls_valid, binary_targets):
    i = pl.program_id(1)

    @pl.when(i == 0)
    def _zero():
        acc_loc_ref[...] = jnp.zeros_like(acc_loc_ref)
        acc_cls_ref[...] = jnp.zeros_like(acc_cls_ref)

    # ---- masked SmoothL1 (beta=1.0, reduction='sum') on lane-dense loc tiles ----
    d = loc_p_ref[...].astype(jnp.float32) - loc_t_ref[...].astype(jnp.float32)
    ad = jnp.abs(d)
    sl1 = jnp.where(ad < 1.0, 0.5 * d * d, ad - 0.5)
    acc_loc_ref[...] += sl1 * mask_ref[...].astype(jnp.float32)

    # ---- focal loss (alpha=0.25, gamma=2) from stable BCE-with-logits ----
    x = cls_p_ref[...].astype(jnp.float32)
    z = cls_t_ref[...].astype(jnp.float32)
    e = jnp.exp(-jnp.abs(x))                                 # single exp per element
    log_pt = jnp.maximum(x, 0.0) - x * z + jnp.log(1.0 + e)  # BCEWithLogits, 'none'
    if binary_targets:
        # For z in {0,1}: exp(-log_pt) == where((x>=0) xor (z==1), e, 1) / (1+e).
        num = jnp.where(jnp.logical_xor(x >= 0.0, z > 0.5), e, 1.0)
        pt = num * pl.reciprocal(1.0 + e, approx=True)
    else:
        pt = jnp.exp(-log_pt)                                # general (non-binary) targets
    f = 0.25 * (1.0 - pt) ** 2 * log_pt
    f = jnp.maximum(f, 1e-16)                                # torch.clamp(min=1e-16)

    # Zero the padded tail (flat element index >= R*C) so it never enters the sum.
    rows, lanes = f.shape
    base = (pl.program_id(0) * inner_steps + i) * (rows * lanes)
    eidx = (base
            + lax.broadcasted_iota(jnp.int32, f.shape, 0) * lanes
            + lax.broadcasted_iota(jnp.int32, f.shape, 1))
    acc_cls_ref[...] += jnp.where(eidx < n_cls_valid, f, 0.0)

    # ---- final cross-lane reduction, once per core ----
    @pl.when(i == inner_steps - 1)
    def _write():
        loc_row = jnp.sum(acc_loc_ref[...], axis=0, keepdims=True)   # (1, 128)
        cls_row = jnp.sum(acc_cls_ref[...], axis=0, keepdims=True)   # (1, 128)
        out_loc_ref[...] = jnp.broadcast_to(loc_row, (8, _LANES))
        out_cls_ref[...] = jnp.broadcast_to(cls_row, (8, _LANES))


def rloss_forward(loc_preds, cls_preds, loc_targets, cls_targets, target_mask,
                  *, anchors_per_step=None, binary_targets=True):
    """Equivalent of RLoss.forward (alpha=0.25, gamma=2, num_classes=cls_preds.shape[-1])."""
    B, N, _ = loc_preds.shape
    C = cls_preds.shape[-1]
    R = B * N

    # ---- choose anchors per grid step: big tiles, but sized for v7x's smaller VMEM ----
    if anchors_per_step is None:
        bytes_per_anchor = 2 * 4 * 4 + 4 + 2 * C * 4   # loc_p/t f32 + mask i8 + cls_p/t f32
        anchors_per_step = max(_ANCHOR_ALIGN,
                               min(65536, (3 * 1024 * 1024) // bytes_per_anchor))
    A = min(_round_up(anchors_per_step, _ANCHOR_ALIGN), _round_up(R, _ANCHOR_ALIGN))

    steps_total = _cdiv(R, A)
    inner_steps = _cdiv(steps_total, _NUM_CORES)
    R_pad = _NUM_CORES * inner_steps * A

    loc_rows_blk = (A * 4) // _LANES
    cls_rows_blk = (A * C) // _LANES
    n_loc_pad = R_pad * 4
    n_cls_pad = R_pad * C

    def lane_dense(x, n_elems_pad):
        x = x.reshape(-1)
        pad = n_elems_pad - x.shape[0]
        if pad:
            x = jnp.pad(x, (0, pad))
        return x.reshape(-1, _LANES)

    # No wrapper-side f32 casts (kernel casts after load); mask is compact int8.
    loc_p = lane_dense(loc_preds, n_loc_pad)
    loc_t = lane_dense(loc_targets, n_loc_pad)
    mask8 = lane_dense(jnp.broadcast_to(target_mask, loc_preds.shape).astype(jnp.int8),
                       n_loc_pad)
    cls_p = lane_dense(cls_preds, n_cls_pad)
    cls_t = lane_dense(cls_targets, n_cls_pad)

    def step_map(p, i):
        return (p * inner_steps + i, 0)

    kernel = functools.partial(_rloss_kernel,
                               inner_steps=inner_steps,
                               n_cls_valid=R * C,
                               binary_targets=binary_targets)

    cost = pl.CostEstimate(
        flops=6 * n_loc_pad + 16 * n_cls_pad,
        transcendentals=2 * n_cls_pad,
        bytes_accessed=9 * n_loc_pad + 8 * n_cls_pad + 2 * _NUM_CORES * 8 * _LANES * 4,
    )

    out_loc, out_cls = pl.pallas_call(
        kernel,
        out_shape=(jax.ShapeDtypeStruct((_NUM_CORES * 8, _LANES), jnp.float32),
                   jax.ShapeDtypeStruct((_NUM_CORES * 8, _LANES), jnp.float32)),
        grid_spec=pltpu.PrefetchScalarGridSpec(
            num_scalar_prefetch=0,
            grid=(_NUM_CORES, inner_steps),
            in_specs=[
                pl.BlockSpec((loc_rows_blk, _LANES), step_map),   # loc_preds
                pl.BlockSpec((loc_rows_blk, _LANES), step_map),   # loc_targets
                pl.BlockSpec((loc_rows_blk, _LANES), step_map),   # expanded int8 mask
                pl.BlockSpec((cls_rows_blk, _LANES), step_map),   # cls_preds
                pl.BlockSpec((cls_rows_blk, _LANES), step_map),   # cls_targets
            ],
            out_specs=(
                pl.BlockSpec((8, _LANES), lambda p, i: (p, 0)),
                pl.BlockSpec((8, _LANES), lambda p, i: (p, 0)),
            ),
            scratch_shapes=[
                pltpu.VMEM((loc_rows_blk, _LANES), jnp.float32),
                pltpu.VMEM((cls_rows_blk, _LANES), jnp.float32),
            ],
        ),
        compiler_params=pltpu.CompilerParams(
            dimension_semantics=("parallel", "arbitrary"),
            vmem_limit_bytes=32 * 1024 * 1024,
        ),
        cost_estimate=cost,
    )(loc_p, loc_t, mask8, cls_p, cls_t)

    # Each core's 8 output rows are identical replicated (1,128) partials: take one per core.
    loc_loss = jnp.sum(out_loc.reshape(_NUM_CORES, 8, _LANES)[:, 0, :])
    f_loss = jnp.sum(out_cls.reshape(_NUM_CORES, 8, _LANES)[:, 0, :])

    pos_num = jnp.sum(target_mask.astype(jnp.int32)).astype(jnp.float32)
    safe_den = jnp.where(pos_num == 0.0, 1.0, pos_num)      # avoid inf/nan before select
    total_loss = (loc_loss + f_loss) / safe_den
    # PyTorch returns python int 0 when pos_num == 0; here we return 0.0 (same value).
    # TODO(synk): the torch module's `print(...)` side effect is not reproduced in-kernel.
    return jnp.where(pos_num == 0.0, 0.0, total_loss)


if __name__ == "__main__":
    key = jax.random.PRNGKey(0)
    B, N, C = 2, 64, 1  # 2 images, 64 anchors, 1 class (RetinaNet num_classes=1)

    k1, k2, k3, k4, k5 = jax.random.split(key, 5)
    loc_preds = jax.random.normal(k1, (B, N, 4), dtype=jnp.float32)
    loc_targets = jax.random.normal(k2, (B, N, 4), dtype=jnp.float32)
    cls_preds = jax.random.normal(k3, (B, N, C), dtype=jnp.float32)
    cls_targets = (jax.random.uniform(k4, (B, N, C)) > 0.5).astype(jnp.float32)
    target_mask = jax.random.uniform(k5, (B, N, 1)) > 0.7  # bool, ~30% positives

    rloss = jax.jit(rloss_forward)
    out = rloss(loc_preds, cls_preds, loc_targets, cls_targets, target_mask)
    jax.block_until_ready(out)
    print("KERNEL_OK")
</pallas_src>

<mosaic_0001>
module attributes {stable_mosaic.version = 11 : i64} {
  func.func @_rloss_kernel(%arg0: i32, %arg1: i32, %arg2: memref<64x128xf32, #tpu.memory_space<vmem>>, %arg3: memref<64x128xf32, #tpu.memory_space<vmem>>, %arg4: memref<64x128xi8, #tpu.memory_space<vmem>>, %arg5: memref<16x128xf32, #tpu.memory_space<vmem>>, %arg6: memref<16x128xf32, #tpu.memory_space<vmem>>, %arg7: memref<8x128xf32, #tpu.memory_space<vmem>>, %arg8: memref<8x128xf32, #tpu.memory_space<vmem>>, %arg9: memref<64x128xf32, #tpu.memory_space<vmem>>, %arg10: memref<16x128xf32, #tpu.memory_space<vmem>>) attributes {dimension_semantics = [#tpu.dimension_semantics<parallel>, #tpu.dimension_semantics<arbitrary>], iteration_bounds = array<i64: 2, 1>, scalar_prefetch = 0 : i64, scratch_operands = 2 : i64, tpu.core_type = #tpu.core_type<tc>, window_params = [{transform_indices = @transform_0, window_bounds = array<i64: 64, 128>}, {transform_indices = @transform_1, window_bounds = array<i64: 64, 128>}, {transform_indices = @transform_2, window_bounds = array<i64: 64, 128>}, {transform_indices = @transform_3, window_bounds = array<i64: 16, 128>}, {transform_indices = @transform_4, window_bounds = array<i64: 16, 128>}, {transform_indices = @transform_5, window_bounds = array<i64: 8, 128>}, {transform_indices = @transform_6, window_bounds = array<i64: 8, 128>}]} {
    %c0_i32 = arith.constant 0 : i32
    %0 = arith.cmpi eq, %arg1, %c0_i32 : i32
    %1 = arith.extui %0 : i1 to i32
    %c0_i32_0 = arith.constant 0 : i32
    %2 = arith.cmpi ne, %1, %c0_i32_0 : i32
    scf.if %2 {
      %cst_34 = arith.constant 0.000000e+00 : f32
      %74 = vector.broadcast %cst_34 : f32 to vector<64x128xf32>
      %c0_35 = arith.constant 0 : index
      %c0_36 = arith.constant 0 : index
      %75 = vector.load %arg9[%c0_35, %c0_36] : memref<64x128xf32, #tpu.memory_space<vmem>>, vector<64x128xf32>
      tpu.vector_store %arg9[%c0_35, %c0_36], %74 {strides = array<i32>} : memref<64x128xf32, #tpu.memory_space<vmem>>, vector<64x128xf32>,
      %cst_37 = arith.constant 0.000000e+00 : f32
      %76 = vector.broadcast %cst_37 : f32 to vector<16x128xf32>
      %c0_38 = arith.constant 0 : index
      %c0_39 = arith.constant 0 : index
      %77 = vector.load %arg10[%c0_38, %c0_39] : memref<16x128xf32, #tpu.memory_space<vmem>>, vector<16x128xf32>
      tpu.vector_store %arg10[%c0_38, %c0_39], %76 {strides = array<i32>} : memref<16x128xf32, #tpu.memory_space<vmem>>, vector<16x128xf32>,
    } else {
    }
    %c0 = arith.constant 0 : index
    %c0_1 = arith.constant 0 : index
    %3 = vector.load %arg2[%c0, %c0_1] : memref<64x128xf32, #tpu.memory_space<vmem>>, vector<64x128xf32>
    %c0_2 = arith.constant 0 : index
    %c0_3 = arith.constant 0 : index
    %4 = vector.load %arg3[%c0_2, %c0_3] : memref<64x128xf32, #tpu.memory_space<vmem>>, vector<64x128xf32>
    %5 = arith.subf %3, %4 : vector<64x128xf32>
    %6 = math.absf %5 : vector<64x128xf32>
    %cst = arith.constant 1.000000e+00 : f32
    %7 = vector.broadcast %cst : f32 to vector<64x128xf32>
    %8 = arith.cmpf olt, %6, %7 : vector<64x128xf32>
    %cst_4 = arith.constant 5.000000e-01 : f32
    %9 = vector.broadcast %cst_4 : f32 to vector<64x128xf32>
    %10 = arith.mulf %9, %5 : vector<64x128xf32>
    %11 = arith.mulf %10, %5 : vector<64x128xf32>
    %cst_5 = arith.constant 5.000000e-01 : f32
    %12 = vector.broadcast %cst_5 : f32 to vector<64x128xf32>
    %13 = arith.subf %6, %12 : vector<64x128xf32>
    %14 = arith.select %8, %11, %13 : vector<64x128xi1>, vector<64x128xf32>
    %c0_6 = arith.constant 0 : index
    %c0_7 = arith.constant 0 : index
    %15 = vector.load %arg9[%c0_6, %c0_7] : memref<64x128xf32, #tpu.memory_space<vmem>>, vector<64x128xf32>
    %c0_8 = arith.constant 0 : index
    %c0_9 = arith.constant 0 : index
    %16 = vector.load %arg4[%c0_8, %c0_9] : memref<64x128xi8, #tpu.memory_space<vmem>>, vector<64x128xi8>
    %17 = arith.sitofp %16 : vector<64x128xi8> to vector<64x128xf32>
    %18 = arith.mulf %14, %17 : vector<64x128xf32>
    %19 = arith.addf %15, %18 : vector<64x128xf32>
    %c0_10 = arith.constant 0 : index
    %c0_11 = arith.constant 0 : index
    %20 = vector.load %arg9[%c0_10, %c0_11] : memref<64x128xf32, #tpu.memory_space<vmem>>, vector<64x128xf32>
    tpu.vector_store %arg9[%c0_10, %c0_11], %19 {strides = array<i32>} : memref<64x128xf32, #tpu.memory_space<vmem>>, vector<64x128xf32>,
    %c0_12 = arith.constant 0 : index
    %c0_13 = arith.constant 0 : index
    %21 = vector.load %arg5[%c0_12, %c0_13] : memref<16x128xf32, #tpu.memory_space<vmem>>, vector<16x128xf32>
    %c0_14 = arith.constant 0 : index
    %c0_15 = arith.constant 0 : index
    %22 = vector.load %arg6[%c0_14, %c0_15] : memref<16x128xf32, #tpu.memory_space<vmem>>, vector<16x128xf32>
    %23 = math.absf %21 : vector<16x128xf32>
    %cst_16 = arith.constant 0.000000e+00 : f32
    %24 = vector.broadcast %cst_16 : f32 to vector<16x128xf32>
    %25 = arith.subf %24, %23 : vector<16x128xf32>
    %26 = math.exp %25 : vector<16x128xf32>
    %cst_17 = arith.constant 0.000000e+00 : f32
    %27 = vector.broadcast %cst_17 : f32 to vector<16x128xf32>
    %28 = arith.maximumf %21, %27 : vector<16x128xf32>
    %29 = arith.mulf %21, %22 : vector<16x128xf32>
    %30 = arith.subf %28, %29 : vector<16x128xf32>
    %cst_18 = arith.constant 1.000000e+00 : f32
    %31 = vector.broadcast %cst_18 : f32 to vector<16x128xf32>
    %32 = arith.addf %31, %26 : vector<16x128xf32>
    %33 = math.log %32 : vector<16x128xf32>
    %34 = arith.addf %30, %33 : vector<16x128xf32>
    %cst_19 = arith.constant 0.000000e+00 : f32
    %35 = vector.broadcast %cst_19 : f32 to vector<16x128xf32>
    %36 = arith.cmpf oge, %21, %35 : vector<16x128xf32>
    %cst_20 = arith.constant 5.000000e-01 : f32
    %37 = vector.broadcast %cst_20 : f32 to vector<16x128xf32>
    %38 = arith.cmpf ogt, %22, %37 : vector<16x128xf32>
    %39 = arith.xori %36, %38 : vector<16x128xi1>
    %cst_21 = arith.constant 1.000000e+00 : f32
    %40 = vector.broadcast %cst_21 : f32 to vector<16x128xf32>
    %41 = arith.select %39, %26, %40 : vector<16x128xi1>, vector<16x128xf32>
    %cst_22 = arith.constant 1.000000e+00 : f32
    %42 = vector.broadcast %cst_22 : f32 to vector<16x128xf32>
    %43 = arith.addf %42, %26 : vector<16x128xf32>
    %44 = tpu.reciprocal %43 {approx = true} : vector<16x128xf32> -> vector<16x128xf32>
    %45 = arith.mulf %41, %44 : vector<16x128xf32>
    %cst_23 = arith.constant 1.000000e+00 : f32
    %46 = vector.broadcast %cst_23 : f32 to vector<16x128xf32>
    %47 = arith.subf %46, %45 : vector<16x128xf32>
    %48 = arith.mulf %47, %47 : vector<16x128xf32>
    %cst_24 = arith.constant 2.500000e-01 : f32
    %49 = vector.broadcast %cst_24 : f32 to vector<16x128xf32>
    %50 = arith.mulf %49, %48 : vector<16x128xf32>
    %51 = arith.mulf %50, %34 : vector<16x128xf32>
    %cst_25 = arith.constant 1.000000e-16 : f32
    %52 = vector.broadcast %cst_25 : f32 to vector<16x128xf32>
    %53 = arith.maximumf %51, %52 : vector<16x128xf32>
    %c1_i32 = arith.constant 1 : i32
    %54 = arith.muli %arg0, %c1_i32 : i32
    %55 = arith.addi %54, %arg1 : i32
    %c2048_i32 = arith.constant 2048 : i32
    %56 = arith.muli %55, %c2048_i32 : i32
    %57 = tpu.iota {dimensions = array<i32: 0>} : vector<16x128xi32>
    %c128_i32 = arith.constant 128 : i32
    %58 = vector.broadcast %c128_i32 : i32 to vector<16x128xi32>
    %59 = arith.muli %57, %58 : vector<16x128xi32>
    %60 = vector.broadcast %56 : i32 to vector<16x128xi32>
    %61 = arith.addi %60, %59 : vector<16x128xi32>
    %62 = tpu.iota {dimensions = array<i32: 1>} : vector<16x128xi32>
    %63 = arith.addi %61, %62 : vector<16x128xi32>
    %c0_26 = arith.constant 0 : index
    %c0_27 = arith.constant 0 : index
    %64 = vector.load %arg10[%c0_26, %c0_27] : memref<16x128xf32, #tpu.memory_space<vmem>>, vector<16x128xf32>
    %c128_i32_28 = arith.constant 128 : i32
    %65 = vector.broadcast %c128_i32_28 : i32 to vector<16x128xi32>
    %66 = arith.cmpi slt, %63, %65 : vector<16x128xi32>
    %cst_29 = arith.constant 0.000000e+00 : f32
    %67 = vector.broadcast %cst_29 : f32 to vector<16x128xf32>
    %68 = arith.select %66, %53, %67 : vector<16x128xi1>, vector<16x128xf32>
    %69 = arith.addf %64, %68 : vector<16x128xf32>
    %c0_30 = arith.constant 0 : index
    %c0_31 = arith.constant 0 : index
    %70 = vector.load %arg10[%c0_30, %c0_31] : memref<16x128xf32, #tpu.memory_space<vmem>>, vector<16x128xf32>
    tpu.vector_store %arg10[%c0_30, %c0_31], %69 {strides = array<i32>} : memref<16x128xf32, #tpu.memory_space<vmem>>, vector<16x128xf32>,
    %c0_i32_32 = arith.constant 0 : i32
    %71 = arith.cmpi eq, %arg1, %c0_i32_32 : i32
    %72 = arith.extui %71 : i1 to i32
    %c0_i32_33 = arith.constant 0 : i32
    %73 = arith.cmpi ne, %72, %c0_i32_33 : i32
    scf.if %73 {
      %c0_34 = arith.constant 0 : index
      %c0_35 = arith.constant 0 : index
      %74 = vector.load %arg9[%c0_34, %c0_35] : memref<64x128xf32, #tpu.memory_space<vmem>>, vector<64x128xf32>
      %cst_36 = arith.constant dense<0.000000e+00> : vector<128xf32>
      %75 = vector.multi_reduction <add>, %74, %cst_36 [0] : vector<64x128xf32> to vector<128xf32>
      %76 = vector.shape_cast %75 : vector<128xf32> to vector<1x128xf32>
      %c0_37 = arith.constant 0 : index
      %c0_38 = arith.constant 0 : index
      %77 = vector.load %arg10[%c0_37, %c0_38] : memref<16x128xf32, #tpu.memory_space<vmem>>, vector<16x128xf32>
      %cst_39 = arith.constant dense<0.000000e+00> : vector<128xf32>
      %78 = vector.multi_reduction <add>, %77, %cst_39 [0] : vector<16x128xf32> to vector<128xf32>
      %79 = vector.shape_cast %78 : vector<128xf32> to vector<1x128xf32>
      %80 = vector.shape_cast %76 : vector<1x128xf32> to vector<1x128xf32>
      %81 = vector.broadcast %80 : vector<1x128xf32> to vector<8x128xf32>
      %c0_40 = arith.constant 0 : index
      %c0_41 = arith.constant 0 : index
      %82 = vector.load %arg7[%c0_40, %c0_41] : memref<8x128xf32, #tpu.memory_space<vmem>>, vector<8x128xf32>
      tpu.vector_store %arg7[%c0_40, %c0_41], %81 {strides = array<i32>} : memref<8x128xf32, #tpu.memory_space<vmem>>, vector<8x128xf32>,
      %83 = vector.shape_cast %79 : vector<1x128xf32> to vector<1x128xf32>
      %84 = vector.broadcast %83 : vector<1x128xf32> to vector<8x128xf32>
      %c0_42 = arith.constant 0 : index
      %c0_43 = arith.constant 0 : index
      %85 = vector.load %arg8[%c0_42, %c0_43] : memref<8x128xf32, #tpu.memory_space<vmem>>, vector<8x128xf32>
      tpu.vector_store %arg8[%c0_42, %c0_43], %84 {strides = array<i32>} : memref<8x128xf32, #tpu.memory_space<vmem>>, vector<8x128xf32>,
    } else {
    }
    return
  }
  func.func @transform_0(%arg0: i32, %arg1: i32) -> (i32, i32) {
    %c1_i32 = arith.constant 1 : i32
    %0 = arith.muli %arg0, %c1_i32 : i32
    %1 = arith.addi %0, %arg1 : i32
    %c0_i32 = arith.constant 0 : i32
    %c0_i32_0 = arith.constant 0 : i32
    return %1, %c0_i32 : i32, i32
  }
  func.func @transform_1(%arg0: i32, %arg1: i32) -> (i32, i32) {
    %c1_i32 = arith.constant 1 : i32
    %0 = arith.muli %arg0, %c1_i32 : i32
    %1 = arith.addi %0, %arg1 : i32
    %c0_i32 = arith.constant 0 : i32
    %c0_i32_0 = arith.constant 0 : i32
    return %1, %c0_i32 : i32, i32
  }
  func.func @transform_2(%arg0: i32, %arg1: i32) -> (i32, i32) {
    %c1_i32 = arith.constant 1 : i32
    %0 = arith.muli %arg0, %c1_i32 : i32
    %1 = arith.addi %0, %arg1 : i32
    %c0_i32 = arith.constant 0 : i32
    %c0_i32_0 = arith.constant 0 : i32
    return %1, %c0_i32 : i32, i32
  }
  func.func @transform_3(%arg0: i32, %arg1: i32) -> (i32, i32) {
    %c1_i32 = arith.constant 1 : i32
    %0 = arith.muli %arg0, %c1_i32 : i32
    %1 = arith.addi %0, %arg1 : i32
    %c0_i32 = arith.constant 0 : i32
    %c0_i32_0 = arith.constant 0 : i32
    return %1, %c0_i32 : i32, i32
  }
  func.func @transform_4(%arg0: i32, %arg1: i32) -> (i32, i32) {
    %c1_i32 = arith.constant 1 : i32
    %0 = arith.muli %arg0, %c1_i32 : i32
    %1 = arith.addi %0, %arg1 : i32
    %c0_i32 = arith.constant 0 : i32
    %c0_i32_0 = arith.constant 0 : i32
    return %1, %c0_i32 : i32, i32
  }
  func.func @transform_5(%arg0: i32, %arg1: i32) -> (i32, i32) {
    %c0_i32 = arith.constant 0 : i32
    %c0_i32_0 = arith.constant 0 : i32
    return %arg0, %c0_i32 : i32, i32
  }
  func.func @transform_6(%arg0: i32, %arg1: i32) -> (i32, i32) {
    %c0_i32 = arith.constant 0 : i32
    %c0_i32_0 = arith.constant 0 : i32
    return %arg0, %c0_i32 : i32, i32
  }
}

</mosaic_0001>

<llo_original>
// kernel: rloss_forward.1
$region0: #{rloss_forward.1}
  #allocation0 [shape = 'u32[]', space=smem, size = 0x4, offset = 0x4, fixed_abs, tag = 'smem constant byte address 0x4 - core index']
  #allocation1 [shape = 'u32[144,128]{1,0:T(1,128)}', space=vmem, size = 0x12000, scoped, tag = 'internal scratch']
  #allocation2 [shape = 'f32[64,128]{1,0:T(8,128)}', space=vmem, size = 0x8000, scoped, tag = 'scratch operand']
  #allocation3 [shape = 'f32[16,128]{1,0:T(8,128)}', space=vmem, size = 0x2000, scoped, tag = 'scratch operand']
  %s0 = inlined_call_operand.vmem [shape: f32[128,128], index: 0, kind: input, shape index: {}]
  %s1 = inlined_call_operand.vmem [shape: f32[128,128], index: 1, kind: input, shape index: {}]
  %s2 = inlined_call_operand.vmem [shape: s8[128,128], index: 2, kind: input, shape index: {}]
  %s3 = inlined_call_operand.vmem [shape: f32[32,128], index: 3, kind: input, shape index: {}]
  %s4 = inlined_call_operand.vmem [shape: f32[32,128], index: 4, kind: input, shape index: {}]
  %s5 = inlined_call_operand.vmem [shape: f32[16,128], index: 5, kind: output, shape index: {0}]
  %s6 = inlined_call_operand.vmem [shape: f32[16,128], index: 6, kind: output, shape index: {1}]
  %7 = xla_tuple %s5, %s6
  %s8 = sld [smem:[#allocation0]]
  $region69: #{rloss_forward.1} parent=0
    _
  %s10 = ssub.s32 1, %s8
  %s11 = scalar_select 0, %s10, %s8
  loop: start=0, step=1, limit=4
  $region2: #{rloss_forward.1} parent=0 // loop_pre_header
    _
  $region3: #{rloss_forward.1} parent=0 // loop_header
    %s13 = sphi 0, %s17
    %p14 = scmp.ge.s32.totalorder %s13, 4
    %s20 = sphi 0, %s32
    %s21 = sphi 0, %s28
    %s22 = sphi 0, %s20
    %s23 = sphi 0, %s21
    %s24 = sphi 0, %s22
    %s25 = sphi 0, %s23
    %s37 = sphi 0, %s39
    %s40 = sphi 0, %s37
    %s41 = sphi 0, %s40
    %s57 = sphi 0, %s41
    %s65 = sphi 0, %s67
    %s68 = sphi 0, %s65
    %s69 = sphi 0, %s68
    %s85 = sphi 0, %s69
    %s93 = sphi 0, %s95
    %s96 = sphi 0, %s93
    %s97 = sphi 0, %s96
    %s113 = sphi 0, %s97
    %s121 = sphi 0, %s123
    %s124 = sphi 0, %s121
    %s125 = sphi 0, %s124
    %s141 = sphi 0, %s125
    %s149 = sphi 0, %s151
    %s152 = sphi 0, %s149
    %s153 = sphi 0, %s152
    %s169 = sphi 0, %s153
    %s175 = sphi 0, %s177
    %s178 = sphi 0, %s175
    %s179 = sphi 0, %s178
    %s195 = sphi 0, %s179
    %s201 = sphi 0, %s203
    %s204 = sphi 0, %s201
    %s205 = sphi 0, %s204
    %s221 = sphi 0, %s205
  $region4: #{rloss_forward.1} parent=0 // loop_header_branch
    %16 = sbr.rel (%p14) target = $region8
  $region5: #{rloss_forward.1} parent=0 // loop_body
    %s18 = ssub.s32 %s13, 1
    %s19 = ssub.s32 %s13, 2
    %s26 = sadd.s32 1, %s21
    %p27 = scmp.ge.s32.totalorder %s26, 1
    %s28 = scalar_select %p27, 0, %s26
    %s29 = sadd.s32 1, %s20
    %s30 = scalar_select %p27, %s29, %s20
    %p31 = scmp.ge.s32.totalorder %s30, 2
    %s32 = scalar_select %p31, 0, %s30
    %s33 = sadd.s32 %s20, %s21
    %s34 = sadd.s32 %s32, %s28
    %s35 = ssub.s32 %s33, %s34
    %p36 = scmp.eq.s32.totalorder %s35, 0
    %s38 = sadd.s32 %s37, 1
    %s39 = scalar_select %p36, %s37, %s38
    %p42 = pneg %p36
    %p43 = scmp.eq.s32.totalorder %s13, 1
    %p44 = por %p42, %p43
    %p45 = scmp.ne.s32.totalorder %s37, %s40
    %p46 = scmp.eq.s32.totalorder %s13, 0
    %p47 = por %p45, %p46
    %p48 = scmp.ne.s32.totalorder %s37, %s40
    %p49 = scmp.eq.s32.totalorder %s18, 1
    %p50 = por %p48, %p49
    %p51 = scmp.ne.s32.totalorder %s40, %s41
    %p52 = scmp.eq.s32.totalorder %s18, 0
    %p53 = por %p51, %p52
    %p54 = scmp.ne.s32.totalorder %s40, %s41
    %p55 = scmp.eq.s32.totalorder %s19, 1
    %p56 = por %p54, %p55
    %p58 = scmp.ne.s32.totalorder %s41, %s57
    %p59 = scmp.eq.s32.totalorder %s19, 0
    %p60 = por %p58, %p59
    %s61 = sadd.s32 %s20, %s21
    %s62 = sadd.s32 %s32, %s28
    %s63 = ssub.s32 %s61, %s62
    %p64 = scmp.eq.s32.totalorder %s63, 0
    %s66 = sadd.s32 %s65, 1
    %s67 = scalar_select %p64, %s65, %s66
    %p70 = pneg %p64
    %p71 = scmp.eq.s32.totalorder %s13, 1
    %p72 = por %p70, %p71
    %p73 = scmp.ne.s32.totalorder %s65, %s68
    %p74 = scmp.eq.s32.totalorder %s13, 0
    %p75 = por %p73, %p74
    %p76 = scmp.ne.s32.totalorder %s65, %s68
    %p77 = scmp.eq.s32.totalorder %s18, 1
    %p78 = por %p76, %p77
    %p79 = scmp.ne.s32.totalorder %s68, %s69
    %p80 = scmp.eq.s32.totalorder %s18, 0
    %p81 = por %p79, %p80
    %p82 = scmp.ne.s32.totalorder %s68, %s69
    %p83 = scmp.eq.s32.totalorder %s19, 1
    %p84 = por %p82, %p83
    %p86 = scmp.ne.s32.totalorder %s69, %s85
    %p87 = scmp.eq.s32.totalorder %s19, 0
    %p88 = por %p86, %p87
    %s89 = sadd.s32 %s20, %s21
    %s90 = sadd.s32 %s32, %s28
    %s91 = ssub.s32 %s89, %s90
    %p92 = scmp.eq.s32.totalorder %s91, 0
    %s94 = sadd.s32 %s93, 1
    %s95 = scalar_select %p92, %s93, %s94
    %p98 = pneg %p92
    %p99 = scmp.eq.s32.totalorder %s13, 1
    %p100 = por %p98, %p99
    %p101 = scmp.ne.s32.totalorder %s93, %s96
    %p102 = scmp.eq.s32.totalorder %s13, 0
    %p103 = por %p101, %p102
    %p104 = scmp.ne.s32.totalorder %s93, %s96
    %p105 = scmp.eq.s32.totalorder %s18, 1
    %p106 = por %p104, %p105
    %p107 = scmp.ne.s32.totalorder %s96, %s97
    %p108 = scmp.eq.s32.totalorder %s18, 0
    %p109 = por %p107, %p108
    %p110 = scmp.ne.s32.totalorder %s96, %s97
    %p111 = scmp.eq.s32.totalorder %s19, 1
    %p112 = por %p110, %p111
    %p114 = scmp.ne.s32.totalorder %s97, %s113
    %p115 = scmp.eq.s32.totalorder %s19, 0
    %p116 = por %p114, %p115
    %s117 = sadd.s32 %s20, %s21
    %s118 = sadd.s32 %s32, %s28
    %s119 = ssub.s32 %s117, %s118
    %p120 = scmp.eq.s32.totalorder %s119, 0
    %s122 = sadd.s32 %s121, 1
    %s123 = scalar_select %p120, %s121, %s122
    %p126 = pneg %p120
    %p127 = scmp.eq.s32.totalorder %s13, 1
    %p128 = por %p126, %p127
    %p129 = scmp.ne.s32.totalorder %s121, %s124
    %p130 = scmp.eq.s32.totalorder %s13, 0
    %p131 = por %p129, %p130
    %p132 = scmp.ne.s32.totalorder %s121, %s124
    %p133 = scmp.eq.s32.totalorder %s18, 1
    %p134 = por %p132, %p133
    %p135 = scmp.ne.s32.totalorder %s124, %s125
    %p136 = scmp.eq.s32.totalorder %s18, 0
    %p137 = por %p135, %p136
    %p138 = scmp.ne.s32.totalorder %s124, %s125
    %p139 = scmp.eq.s32.totalorder %s19, 1
    %p140 = por %p138, %p139
    %p142 = scmp.ne.s32.totalorder %s125, %s141
    %p143 = scmp.eq.s32.totalorder %s19, 0
    %p144 = por %p142, %p143
    %s145 = sadd.s32 %s20, %s21
    %s146 = sadd.s32 %s32, %s28
    %s147 = ssub.s32 %s145, %s146
    %p148 = scmp.eq.s32.totalorder %s147, 0
    %s150 = sadd.s32 %s149, 1
    %s151 = scalar_select %p148, %s149, %s150
    %p154 = pneg %p148
    %p155 = scmp.eq.s32.totalorder %s13, 1
    %p156 = por %p154, %p155
    %p157 = scmp.ne.s32.totalorder %s149, %s152
    %p158 = scmp.eq.s32.totalorder %s13, 0
    %p159 = por %p157, %p158
    %p160 = scmp.ne.s32.totalorder %s149, %s152
    %p161 = scmp.eq.s32.totalorder %s18, 1
    %p162 = por %p160, %p161
    %p163 = scmp.ne.s32.totalorder %s152, %s153
    %p164 = scmp.eq.s32.totalorder %s18, 0
    %p165 = por %p163, %p164
    %p166 = scmp.ne.s32.totalorder %s152, %s153
    %p167 = scmp.eq.s32.totalorder %s19, 1
    %p168 = por %p166, %p167
    %p170 = scmp.ne.s32.totalorder %s153, %s169
    %p171 = scmp.eq.s32.totalorder %s19, 0
    %p172 = por %p170, %p171
    %s173 = ssub.s32 %s20, %s32
    %p174 = scmp.eq.s32.totalorder %s173, 0
    %s176 = sadd.s32 %s175, 1
    %s177 = scalar_select %p174, %s175, %s176
    %p180 = pneg %p174
    %p181 = scmp.eq.s32.totalorder %s13, 1
    %p182 = por %p180, %p181
    %p183 = scmp.ne.s32.totalorder %s175, %s178
    %p184 = scmp.eq.s32.totalorder %s13, 0
    %p185 = por %p183, %p184
    %p186 = scmp.ne.s32.totalorder %s175, %s178
    %p187 = scmp.eq.s32.totalorder %s18, 1
    %p188 = por %p186, %p187
    %p189 = scmp.ne.s32.totalorder %s178, %s179
    %p190 = scmp.eq.s32.totalorder %s18, 0
    %p191 = por %p189, %p190
    %p192 = scmp.ne.s32.totalorder %s178, %s179
    %p193 = scmp.eq.s32.totalorder %s19, 1
    %p194 = por %p192, %p193
    %p196 = scmp.ne.s32.totalorder %s179, %s195
    %p197 = scmp.eq.s32.totalorder %s19, 0
    %p198 = por %p196, %p197
    %s199 = ssub.s32 %s20, %s32
    %p200 = scmp.eq.s32.totalorder %s199, 0
    %s202 = sadd.s32 %s201, 1
    %s203 = scalar_select %p200, %s201, %s202
    %p206 = pneg %p200
    %p207 = scmp.eq.s32.totalorder %s13, 1
    %p208 = por %p206, %p207
    %p209 = scmp.ne.s32.totalorder %s201, %s204
    %p210 = scmp.eq.s32.totalorder %s13, 0
    %p211 = por %p209, %p210
    %p212 = scmp.ne.s32.totalorder %s201, %s204
    %p213 = scmp.eq.s32.totalorder %s18, 1
    %p214 = por %p212, %p213
    %p215 = scmp.ne.s32.totalorder %s204, %s205
    %p216 = scmp.eq.s32.totalorder %s18, 0
    %p217 = por %p215, %p216
    %p218 = scmp.ne.s32.totalorder %s204, %s205
    %p219 = scmp.eq.s32.totalorder %s19, 1
    %p220 = por %p218, %p219
    %p222 = scmp.ne.s32.totalorder %s205, %s221
    %p223 = scmp.eq.s32.totalorder %s19, 0
    %p224 = por %p222, %p223
    %p225 = scmp.le.s32.totalorder 1, %s13
    %p226 = scmp.lt.s32.totalorder %s13, 3
    %p227 = pnand %p225, %p226
    %p228 = pneg %p227
    // Predicated region
    $region9: #{rloss_forward.1} parent=5 // pred_check
      _
    $region10: #{rloss_forward.1} parent=5 // pred_check_branch
      %230 = sbr.rel (%p227) target = $region12
    $region11: #{rloss_forward.1} parent=5 // pred_region
      %s231 = ssub.s32 %s13, 1
    $region12: #{rloss_forward.1} parent=5 // pred_fallthru
      _
    %p232 = scmp.lt.s32.totalorder %s13, 2
    // Predicated region
    $region13: #{rloss_forward.1} parent=5 // pred_check
      %p233 = pneg %p232
    $region14: #{rloss_forward.1} parent=5 // pred_check_branch
      %235 = sbr.rel (%p233) target = $region16
    $region15: #{rloss_forward.1} parent=5 // pred_region
      // Predicated region
      $region17: #{rloss_forward.1} parent=15 // pred_check
        %p236 = pneg %p47
      $region18: #{rloss_forward.1} parent=15 // pred_check_branch
        %238 = sbr.rel (%p236) target = $region20
      $region19: #{rloss_forward.1} parent=15 // pred_region
        %s239 = sadd.s32 %s20, %s21
        %s240 = smul.u32 8, %s239
        %p241 = scmp.lt.s32.totalorder %s240, 15
        %s242 = scalar_select %p241, %s240, 15
        %s243 = smul.addr %s242, 8
        %s244 = scalar_lea.vmem %s0, %s243
        %s245 = sadd.s32 %s20, %s21
        %s246 = smul.u32 8, %s245
      $region20: #{rloss_forward.1} parent=15 // pred_fallthru
        _
      // Predicated region
      $region21: #{rloss_forward.1} parent=15 // pred_check
        %p247 = pneg %p75
      $region22: #{rloss_forward.1} parent=15 // pred_check_branch
        %249 = sbr.rel (%p247) target = $region24
      $region23: #{rloss_forward.1} parent=15 // pred_region
        %s250 = sadd.s32 %s20, %s21
        %s251 = smul.u32 8, %s250
        %p252 = scmp.lt.s32.totalorder %s251, 15
        %s253 = scalar_select %p252, %s251, 15
        %s254 = smul.addr %s253, 8
        %s255 = scalar_lea.vmem %s1, %s254
        %s256 = sadd.s32 %s20, %s21
        %s257 = smul.u32 8, %s256
      $region24: #{rloss_forward.1} parent=15 // pred_fallthru
        _
      // Predicated region
      $region25: #{rloss_forward.1} parent=15 // pred_check
        %p258 = pneg %p103
      $region26: #{rloss_forward.1} parent=15 // pred_check_branch
        %260 = sbr.rel (%p258) target = $region28
      $region27: #{rloss_forward.1} parent=15 // pred_region
        %s261 = sadd.s32 %s20, %s21
        %s262 = smul.u32 2, %s261
        %p263 = scmp.lt.s32.totalorder %s262, 3
        %s264 = scalar_select %p263, %s262, 3
        %s265 = smul.addr %s264, 8
        %s266 = scalar_lea.vmem %s2, %s265
        %s267 = sadd.s32 %s20, %s21
        %s268 = smul.u32 2, %s267
      $region28: #{rloss_forward.1} parent=15 // pred_fallthru
        _
      // Predicated region
      $region29: #{rloss_forward.1} parent=15 // pred_check
        %p269 = pneg %p131
      $region30: #{rloss_forward.1} parent=15 // pred_check_branch
        %271 = sbr.rel (%p269) target = $region32
      $region31: #{rloss_forward.1} parent=15 // pred_region
        %s272 = sadd.s32 %s20, %s21
        %s273 = smul.u32 2, %s272
        %p274 = scmp.lt.s32.totalorder %s273, 3
        %s275 = scalar_select %p274, %s273, 3
        %s276 = smul.addr %s275, 8
        %s277 = scalar_lea.vmem %s3, %s276
        %s278 = sadd.s32 %s20, %s21
        %s279 = smul.u32 2, %s278
      $region32: #{rloss_forward.1} parent=15 // pred_fallthru
        _
      // Predicated region
      $region33: #{rloss_forward.1} parent=15 // pred_check
        %p280 = pneg %p159
      $region34: #{rloss_forward.1} parent=15 // pred_check_branch
        %282 = sbr.rel (%p280) target = $region36
      $region35: #{rloss_forward.1} parent=15 // pred_region
        %s283 = sadd.s32 %s20, %s21
        %s284 = smul.u32 2, %s283
        %p285 = scmp.lt.s32.totalorder %s284, 3
        %s286 = scalar_select %p285, %s284, 3
        %s287 = smul.addr %s286, 8
        %s288 = scalar_lea.vmem %s4, %s287
        %s289 = sadd.s32 %s20, %s21
        %s290 = smul.u32 2, %s289
      $region36: #{rloss_forward.1} parent=15 // pred_fallthru
        _
    $region16: #{rloss_forward.1} parent=5 // pred_fallthru
      _
    %p291 = scmp.le.s32.totalorder 1, %s13
    %p292 = scmp.lt.s32.totalorder %s13, 3
    %p293 = pnand %p291, %p292
    %p294 = pneg %p293
    // Predicated region
    $region37: #{rloss_forward.1} parent=5 // pred_check
      _
    $region38: #{rloss_forward.1} parent=5 // pred_check_branch
      %296 = sbr.rel (%p293) target = $region40
    $region39: #{rloss_forward.1} parent=5 // pred_region
      %s297 = ssub.s32 %s13, 1
      %s298 = sadd.s32 %s22, %s23
      %s299 = smul.u32 8, %s298
      %p300 = scmp.lt.s32.totalorder %s299, 15
      %s301 = scalar_select %p300, %s299, 15
      %s302 = smul.addr %s301, 8
      %s303 = scalar_lea.vmem %s0, %s302
      %p304 = pneg %p53
      %p305 = pneg %p50
      %s306 = sadd.s32 %s22, %s23
      %s307 = smul.u32 8, %s306
      %p308 = scmp.lt.s32.totalorder %s307, 15
      %s309 = scalar_select %p308, %s307, 15
      %s310 = smul.addr %s309, 8
      %s311 = scalar_lea.vmem %s1, %s310
      %p312 = pneg %p81
      %p313 = pneg %p78
      %s314 = sadd.s32 %s22, %s23
      %s315 = smul.u32 2, %s314
      %p316 = scmp.lt.s32.totalorder %s315, 3
      %s317 = scalar_select %p316, %s315, 3
      %s318 = smul.addr %s317, 8
      %s319 = scalar_lea.vmem %s2, %s318
      %p320 = pneg %p109
      %p321 = pneg %p106
      %s322 = sadd.s32 %s22, %s23
      %s323 = smul.u32 2, %s322
      %p324 = scmp.lt.s32.totalorder %s323, 3
      %s325 = scalar_select %p324, %s323, 3
      %s326 = smul.addr %s325, 8
      %s327 = scalar_lea.vmem %s3, %s326
      %p328 = pneg %p137
      %p329 = pneg %p134
      %s330 = sadd.s32 %s22, %s23
      %s331 = smul.u32 2, %s330
      %p332 = scmp.lt.s32.totalorder %s331, 3
      %s333 = scalar_select %p332, %s331, 3
      %s334 = smul.addr %s333, 8
      %s335 = scalar_lea.vmem %s4, %s334
      %p336 = pneg %p165
      %p337 = pneg %p162
      %p338 = pneg %p191
      %p339 = pneg %p188
      %p340 = scmp.lt.s32.totalorder %s22, 1
      %s341 = scalar_select %p340, %s22, 1
      %s342 = smul.addr %s341, 8
      %s343 = scalar_lea.vmem %s5, %s342
      %p344 = pneg %p217
      %p345 = pneg %p214
      %p346 = scmp.lt.s32.totalorder %s22, 1
      %s347 = scalar_select %p346, %s22, 1
      %s348 = smul.addr %s347, 8
      %s349 = scalar_lea.vmem %s6, %s348
      %s350 = sadd.s32 %s22, %s23
      %s351 = smul.u32 8, %s350
      %p352 = scmp.lt.s32.totalorder %s351, 15
      %s353 = scalar_select %p352, %s351, 15
      %s354 = smul.addr %s353, 8
      %s355 = scalar_lea.vmem %s0, %s354
      %s356 = sadd.s32 %s22, %s23
      %s357 = smul.u32 8, %s356
      %s358 = sadd.s32 %s22, %s23
      %s359 = smul.u32 8, %s358
      %p360 = scmp.lt.s32.totalorder %s359, 15
      %s361 = scalar_select %p360, %s359, 15
      %s362 = smul.addr %s361, 8
      %s363 = scalar_lea.vmem %s1, %s362
      %s364 = sadd.s32 %s22, %s23
      %s365 = smul.u32 8, %s364
      %s366 = sadd.s32 %s22, %s23
      %s367 = smul.u32 2, %s366
      %p368 = scmp.lt.s32.totalorder %s367, 3
      %s369 = scalar_select %p368, %s367, 3
      %s370 = smul.addr %s369, 8
      %s371 = scalar_lea.vmem %s2, %s370
      %s372 = sadd.s32 %s22, %s23
      %s373 = smul.u32 2, %s372
      %s374 = sadd.s32 %s22, %s23
      %s375 = smul.u32 2, %s374
      %p376 = scmp.lt.s32.totalorder %s375, 3
      %s377 = scalar_select %p376, %s375, 3
      %s378 = smul.addr %s377, 8
      %s379 = scalar_lea.vmem %s3, %s378
      %s380 = sadd.s32 %s22, %s23
      %s381 = smul.u32 2, %s380
      %s382 = sadd.s32 %s22, %s23
      %s383 = smul.u32 2, %s382
      %p384 = scmp.lt.s32.totalorder %s383, 3
      %s385 = scalar_select %p384, %s383, 3
      %s386 = smul.addr %s385, 8
      %s387 = scalar_lea.vmem %s4, %s386
      %s388 = sadd.s32 %s22, %s23
      %s389 = smul.u32 2, %s388
      %p390 = scmp.lt.s32.totalorder %s22, 1
      %s391 = scalar_select %p390, %s22, 1
      %s392 = smul.addr %s391, 8
      %s393 = scalar_lea.vmem %s5, %s392
      %p394 = scmp.lt.s32.totalorder %s22, 1
      %s395 = scalar_select %p394, %s22, 1
      %s396 = smul.addr %s395, 8
      %s397 = scalar_lea.vmem %s6, %s396
      %p398 = scmp.eq.s32.totalorder %s23, 0
      // Predicated region
      $region41: #{rloss_forward.1} parent=39 // pred_check
        %p399 = pneg %p398
      $region42: #{rloss_forward.1} parent=39 // pred_check_branch
        %401 = sbr.rel (%p399) target = $region44
      $region43: #{rloss_forward.1} parent=39 // pred_region
        %402 = vst [vmem:[#allocation2] sm:$0xff] 0.0
        %403 = vst [vmem:[#allocation2 + $0x8] sm:$0xff] 0.0
        %404 = vst [vmem:[#allocation2 + $0x10] sm:$0xff] 0.0
        %405 = vst [vmem:[#allocation2 + $0x18] sm:$0xff] 0.0
        %406 = vst [vmem:[#allocation2 + $0x20] sm:$0xff] 0.0
        %407 = vst [vmem:[#allocation2 + $0x28] sm:$0xff] 0.0
        %408 = vst [vmem:[#allocation2 + $0x30] sm:$0xff] 0.0
        %409 = vst [vmem:[#allocation2 + $0x38] sm:$0xff] 0.0
        %410 = vst [vmem:[#allocation3] sm:$0xff] 0.0
        %411 = vst [vmem:[#allocation3 + $0x8] sm:$0xff] 0.0
      $region44: #{rloss_forward.1} parent=39 // pred_fallthru
        _
      %v412 = vld [vmem:[%s355] sm:$0xff]
      %v413 = vld [vmem:[%s355 + $0x8] sm:$0xff]
      %v414 = vld [vmem:[%s355 + $0x10] sm:$0xff]
      %v415 = vld [vmem:[%s355 + $0x18] sm:$0xff]
      %v416 = vld [vmem:[%s355 + $0x20] sm:$0xff]
      %v417 = vld [vmem:[%s355 + $0x28] sm:$0xff]
      %v418 = vld [vmem:[%s355 + $0x30] sm:$0xff]
      %v419 = vld [vmem:[%s355 + $0x38] sm:$0xff]
      %v420 = vld [vmem:[%s363] sm:$0xff]
      %v421 = vld [vmem:[%s363 + $0x8] sm:$0xff]
      %v422 = vld [vmem:[%s363 + $0x10] sm:$0xff]
      %v423 = vld [vmem:[%s363 + $0x18] sm:$0xff]
      %v424 = vld [vmem:[%s363 + $0x20] sm:$0xff]
      %v425 = vld [vmem:[%s363 + $0x28] sm:$0xff]
      %v426 = vld [vmem:[%s363 + $0x30] sm:$0xff]
      %v427 = vld [vmem:[%s363 + $0x38] sm:$0xff]
      %v428 = vsub.f32 %v412, %v420
      %v429 = vsub.f32 %v413, %v421
      %v430 = vsub.f32 %v414, %v422
      %v431 = vsub.f32 %v415, %v423
      %v432 = vsub.f32 %v416, %v424
      %v433 = vsub.f32 %v417, %v425
      %v434 = vsub.f32 %v418, %v426
      %v435 = vsub.f32 %v419, %v427
      %v436 = vand.u32 2147483647, %v428
      %v437 = vand.u32 2147483647, %v429
      %v438 = vand.u32 2147483647, %v430
      %v439 = vand.u32 2147483647, %v431
      %v440 = vand.u32 2147483647, %v432
      %v441 = vand.u32 2147483647, %v433
      %v442 = vand.u32 2147483647, %v434
      %v443 = vand.u32 2147483647, %v435
      %vm444 = vcmp.lt.f32.partialorder %v436, 1.0
      %vm445 = vcmp.lt.f32.partialorder %v437, 1.0
      %vm446 = vcmp.lt.f32.partialorder %v438, 1.0
      %vm447 = vcmp.lt.f32.partialorder %v439, 1.0
      %vm448 = vcmp.lt.f32.partialorder %v440, 1.0
      %vm449 = vcmp.lt.f32.partialorder %v441, 1.0
      %vm450 = vcmp.lt.f32.partialorder %v442, 1.0
      %vm451 = vcmp.lt.f32.partialorder %v443, 1.0
      %v452 = vmul.f32 %v428, 0.5
      %v453 = vmul.f32 %v429, 0.5
      %v454 = vmul.f32 %v430, 0.5
      %v455 = vmul.f32 %v431, 0.5
      %v456 = vmul.f32 %v432, 0.5
      %v457 = vmul.f32 %v433, 0.5
      %v458 = vmul.f32 %v434, 0.5
      %v459 = vmul.f32 %v435, 0.5
      %v460 = vmul.f32 %v452, %v428
      %v461 = vmul.f32 %v453, %v429
      %v462 = vmul.f32 %v454, %v430
      %v463 = vmul.f32 %v455, %v431
      %v464 = vmul.f32 %v456, %v432
      %v465 = vmul.f32 %v457, %v433
      %v466 = vmul.f32 %v458, %v434
      %v467 = vmul.f32 %v459, %v435
      %v468 = vsub.f32 %v436, 0.5
      %v469 = vsub.f32 %v437, 0.5
      %v470 = vsub.f32 %v438, 0.5
      %v471 = vsub.f32 %v439, 0.5
      %v472 = vsub.f32 %v440, 0.5
      %v473 = vsub.f32 %v441, 0.5
      %v474 = vsub.f32 %v442, 0.5
      %v475 = vsub.f32 %v443, 0.5
      %v476 = vsel %vm444, %v460, %v468
      %v477 = vsel %vm445, %v461, %v469
      %v478 = vsel %vm446, %v462, %v470
      %v479 = vsel %vm447, %v463, %v471
      %v480 = vsel %vm448, %v464, %v472
      %v481 = vsel %vm449, %v465, %v473
      %v482 = vsel %vm450, %v466, %v474
      %v483 = vsel %vm451, %v467, %v475
      %v484 = vld [vmem:[#allocation2] sm:$0xff]
      %v485 = vld [vmem:[#allocation2 + $0x8] sm:$0xff]
      %v486 = vld [vmem:[#allocation2 + $0x10] sm:$0xff]
      %v487 = vld [vmem:[#allocation2 + $0x18] sm:$0xff]
      %v488 = vld [vmem:[#allocation2 + $0x20] sm:$0xff]
      %v489 = vld [vmem:[#allocation2 + $0x28] sm:$0xff]
      %v490 = vld [vmem:[#allocation2 + $0x30] sm:$0xff]
      %v491 = vld [vmem:[#allocation2 + $0x38] sm:$0xff]
      %v492 = vld [vmem:[%s371] sm:$0xff]
      %v493 = vld [vmem:[%s371 + $0x8] sm:$0xff]
      %v494 = vunpack.c.0.s8 %v492
      %v495 = vunpack.c.1.s8 %v492
      %v496 = vunpack.c.2.s8 %v492
      %v497 = vunpack.c.3.s8 %v492
      %v498 = vunpack.c.0.s8 %v493
      %v499 = vunpack.c.1.s8 %v493
      %v500 = vunpack.c.2.s8 %v493
      %v501 = vunpack.c.3.s8 %v493
      %v502 = vcvt.s32.f32 %v494
      %v503 = vcvt.s32.f32 %v495
      %v504 = vcvt.s32.f32 %v496
      %v505 = vcvt.s32.f32 %v497
      %v506 = vcvt.s32.f32 %v498
      %v507 = vcvt.s32.f32 %v499
      %v508 = vcvt.s32.f32 %v500
      %v509 = vcvt.s32.f32 %v501
      %v510 = vmul.f32 %v476, %v502
      %v511 = vmul.f32 %v477, %v503
      %v512 = vmul.f32 %v478, %v504
      %v513 = vmul.f32 %v479, %v505
      %v514 = vmul.f32 %v480, %v506
      %v515 = vmul.f32 %v481, %v507
      %v516 = vmul.f32 %v482, %v508
      %v517 = vmul.f32 %v483, %v509
      %v518 = vadd.f32 %v484, %v510
      %v519 = vadd.f32 %v485, %v511
      %v520 = vadd.f32 %v486, %v512
      %v521 = vadd.f32 %v487, %v513
      %v522 = vadd.f32 %v488, %v514
      %v523 = vadd.f32 %v489, %v515
      %v524 = vadd.f32 %v490, %v516
      %v525 = vadd.f32 %v491, %v517
      %526 = vst [vmem:[#allocation2] sm:$0xff] %v518
      %527 = vst [vmem:[#allocation2 + $0x8] sm:$0xff] %v519
      %528 = vst [vmem:[#allocation2 + $0x10] sm:$0xff] %v520
      %529 = vst [vmem:[#allocation2 + $0x18] sm:$0xff] %v521
      %530 = vst [vmem:[#allocation2 + $0x20] sm:$0xff] %v522
      %531 = vst [vmem:[#allocation2 + $0x28] sm:$0xff] %v523
      %532 = vst [vmem:[#allocation2 + $0x30] sm:$0xff] %v524
      %533 = vst [vmem:[#allocation2 + $0x38] sm:$0xff] %v525
      %v534 = vld [vmem:[%s379] sm:$0xff]
      %v535 = vld [vmem:[%s379 + $0x8] sm:$0xff]
      %v536 = vld [vmem:[%s387] sm:$0xff]
      %v537 = vld [vmem:[%s387 + $0x8] sm:$0xff]
      %v538 = vand.u32 2147483647, %v534
      %v539 = vand.u32 2147483647, %v535
      %v540 = vsub.f32 0.0, %v538
      %v541 = vsub.f32 0.0, %v539
      %v542 = vmul.f32 %v540, 1.442695
      %v543 = vpow.pop %v542
      %v544 = vmul.f32 %v541, 1.442695
      %v545 = vpow.pop %v544
      %v546 = vmax.f32 %v534, 0.0
      %v547 = vmax.f32 %v535, 0.0
      %v548 = vmul.f32 %v534, %v536
      %v549 = vmul.f32 %v535, %v537
      %v550 = vsub.f32 %v546, %v548
      %v551 = vsub.f32 %v547, %v549
      %v552 = vadd.f32 %v543, 1.0
      %v553 = vadd.f32 %v545, 1.0
      %v554 = vlog2.pop %v552
      %v555 = vmul.f32 %v554, 0.6931472
      %v556 = vlog2.pop %v553
      %v557 = vmul.f32 %v556, 0.6931472
      %v558 = vadd.f32 %v550, %v555
      %v559 = vadd.f32 %v551, %v557
      %vm560 = vcmp.ge.f32.partialorder %v534, 0.0
      %vm561 = vcmp.ge.f32.partialorder %v535, 0.0
      %vm562 = vcmp.gt.f32.partialorder %v536, 0.5
      %vm563 = vcmp.gt.f32.partialorder %v537, 0.5
      %vm564 = vmxor %vm560, %vm562
      %vm565 = vmxor %vm561, %vm563
      %v566 = vsel %vm564, %v543, 1.0
      %v567 = vsel %vm565, %v545, 1.0
      %v568 = vrcp.pop %v552
      %v569 = vrcp.pop %v553
      %v570 = vmul.f32 %v566, %v568
      %v571 = vmul.f32 %v567, %v569
      %v572 = vsub.f32 1.0, %v570
      %v573 = vsub.f32 1.0, %v571
      %v574 = vmul.f32 %v572, %v572
      %v575 = vmul.f32 %v573, %v573
      %v576 = vmul.f32 %v574, 0.25
      %v577 = vmul.f32 %v575, 0.25
      %v578 = vmul.f32 %v576, %v558
      %v579 = vmul.f32 %v577, %v559
      %v580 = vmax.f32 %v578, 1e-16
      %v581 = vmax.f32 %v579, 1e-16
      %s582 = sadd.s32 %s22, %s23
      %s583 = smul.u32 %s582, 2048
      %v584 = vlaneseq
      %v585 = vshrl.u32 %v584, 7
      %v586 = vadd.s32 %v585, 8
      %v587 = vmul.u32 %v585, 128
      %v588 = vmul.u32 %v586, 128
      %v589 = vstv %s583
      %v590 = vadd.s32 %v589, %v587
      %v591 = vadd.s32 %v589, %v588
      %v592 = vlaneseq
      %v593 = vand.u32 %v592, 127
      %v594 = vadd.s32 %v590, %v593
      %v595 = vadd.s32 %v591, %v593
      %v596 = vld [vmem:[#allocation3] sm:$0xff]
      %v597 = vld [vmem:[#allocation3 + $0x8] sm:$0xff]
      %vm598 = vcmp.lt.s32.totalorder %v594, 128
      %vm599 = vcmp.lt.s32.totalorder %v595, 128
      %v600 = vsel %vm598, %v580, 0.0
      %v601 = vsel %vm599, %v581, 0.0
      %v602 = vadd.f32 %v596, %v600
      %v603 = vadd.f32 %v597, %v601
      %604 = vst [vmem:[#allocation3] sm:$0xff] %v602
      %605 = vst [vmem:[#allocation3 + $0x8] sm:$0xff] %v603
      // Predicated region
      $region45: #{rloss_forward.1} parent=39 // pred_check
        %p606 = pneg %p398
      $region46: #{rloss_forward.1} parent=39 // pred_check_branch
        %608 = sbr.rel (%p606) target = $region48
      $region47: #{rloss_forward.1} parent=39 // pred_region
        %v609 = vld [vmem:[#allocation2] sm:$0xff]
        %v610 = vld [vmem:[#allocation2 + $0x8] sm:$0xff]
        %v611 = vld [vmem:[#allocation2 + $0x10] sm:$0xff]
        %v612 = vld [vmem:[#allocation2 + $0x18] sm:$0xff]
        %v613 = vld [vmem:[#allocation2 + $0x20] sm:$0xff]
        %v614 = vld [vmem:[#allocation2 + $0x28] sm:$0xff]
        %v615 = vld [vmem:[#allocation2 + $0x30] sm:$0xff]
        %v616 = vld [vmem:[#allocation2 + $0x38] sm:$0xff]
        %v617 = vadd.f32 %v609, %v610
        %v618 = vadd.f32 %v617, %v611
        %v619 = vadd.f32 %v618, %v612
        %v620 = vadd.f32 %v619, %v613
        %v621 = vadd.f32 %v620, %v614
        %v622 = vadd.f32 %v621, %v615
        %v623 = vadd.f32 %v622, %v616
        %v624 = vrot.slane %v623, 4
        %v625 = vadd.f32 %v623, %v624
        %v626 = vrot.slane %v625, 2
        %v627 = vadd.f32 %v625, %v626
        %v628 = vrot.slane %v627, 1
        %v629 = vadd.f32 %v627, %v628
        %v630 = vld [vmem:[#allocation3] sm:$0xff]
        %v631 = vld [vmem:[#allocation3 + $0x8] sm:$0xff]
        %v632 = vadd.f32 %v630, %v631
        %v633 = vrot.slane %v632, 4
        %v634 = vadd.f32 %v632, %v633
        %v635 = vrot.slane %v634, 2
        %v636 = vadd.f32 %v634, %v635
        %v637 = vrot.slane %v636, 1
        %v638 = vadd.f32 %v636, %v637
        %639 = vst [vmem:[%s393] sm:$0xff] %v629
        %640 = vst [vmem:[%s397] sm:$0xff] %v638
      $region48: #{rloss_forward.1} parent=39 // pred_fallthru
        _
      %p641 = scmp.lt.s32.totalorder %s22, 1
      %s642 = scalar_select %p641, %s22, 1
      %s643 = smul.addr %s642, 8
      %s644 = scalar_lea.vmem %s5, %s643
      %p645 = scmp.lt.s32.totalorder %s22, 1
      %s646 = scalar_select %p645, %s22, 1
      %s647 = smul.addr %s646, 8
      %s648 = scalar_lea.vmem %s6, %s647
      // Predicated region
      $region49: #{rloss_forward.1} parent=39 // pred_check
        %p649 = pneg %p188
      $region50: #{rloss_forward.1} parent=39 // pred_check_branch
        %651 = sbr.rel (%p649) target = $region52
      $region51: #{rloss_forward.1} parent=39 // pred_region
        _
      $region52: #{rloss_forward.1} parent=39 // pred_fallthru
        _
      // Predicated region
      $region53: #{rloss_forward.1} parent=39 // pred_check
        %p652 = pneg %p214
      $region54: #{rloss_forward.1} parent=39 // pred_check_branch
        %654 = sbr.rel (%p652) target = $region56
      $region55: #{rloss_forward.1} parent=39 // pred_region
        _
      $region56: #{rloss_forward.1} parent=39 // pred_fallthru
        _
    $region40: #{rloss_forward.1} parent=5 // pred_fallthru
      _
    %p655 = scmp.le.s32.totalorder 2, %s13
    // Predicated region
    $region57: #{rloss_forward.1} parent=5 // pred_check
      %p656 = pneg %p655
    $region58: #{rloss_forward.1} parent=5 // pred_check_branch
      %658 = sbr.rel (%p656) target = $region60
    $region59: #{rloss_forward.1} parent=5 // pred_region
      %s659 = ssub.s32 %s13, 2
      // Predicated region
      $region61: #{rloss_forward.1} parent=59 // pred_check
        %p660 = pneg %p194
      $region62: #{rloss_forward.1} parent=59 // pred_check_branch
        %662 = sbr.rel (%p660) target = $region64
      $region63: #{rloss_forward.1} parent=59 // pred_region
        %p663 = scmp.lt.s32.totalorder %s24, 1
        %s664 = scalar_select %p663, %s24, 1
        %s665 = smul.addr %s664, 8
        %s666 = scalar_lea.vmem %s5, %s665
      $region64: #{rloss_forward.1} parent=59 // pred_fallthru
        _
      // Predicated region
      $region65: #{rloss_forward.1} parent=59 // pred_check
        %p667 = pneg %p220
      $region66: #{rloss_forward.1} parent=59 // pred_check_branch
        %669 = sbr.rel (%p667) target = $region68
      $region67: #{rloss_forward.1} parent=59 // pred_region
        %p670 = scmp.lt.s32.totalorder %s24, 1
        %s671 = scalar_select %p670, %s24, 1
        %s672 = smul.addr %s671, 8
        %s673 = scalar_lea.vmem %s6, %s672
      $region68: #{rloss_forward.1} parent=59 // pred_fallthru
        _
    $region60: #{rloss_forward.1} parent=5 // pred_fallthru
      _
  $region6: #{rloss_forward.1} parent=0 // loop_footer
    %s17 = sadd.s32 1, %s13
  $region7: #{rloss_forward.1} parent=0 // loop_footer_branch
    %12 = sbr.rel target = $region3
  $region8: #{rloss_forward.1} parent=0 // loop_exit
    _

</llo_original>
